<compile_context>
chip_gen: v5e
topology: v5e:2x2
jax: 0.10.0
libtpu: 0.0.40
codegen_flags: <defaults>
</compile_context>

<pallas_src>
import math
import jax
import jax.numpy as jnp
from jax import lax
from jax.experimental import pallas as pl
from jax.experimental.pallas import tpu as pltpu

# ---- model hyperparameters (small, consistent with the module's forward) ----
NUM_ATTN_HEADS = 1
ATTENTION_DIM = 32
PROJ_DIM = NUM_ATTN_HEADS * ATTENTION_DIM     # D
LQ = 8                                        # query length
LK = 16                                       # key / value length
SCALE = 1.0 / math.sqrt(ATTENTION_DIM)

# dot_general dimension numbers: contract the LAST axis of both operands,
# i.e. x @ W^T — the MXU consumes the RHS transposed, no transpose op emitted.
_TRANS_B = (((1,), (1,)), ((), ()))


def _attn_kernel(q_ref, k_ref, v_ref, w_ref, o_ref):
    D = PROJ_DIM
    bq = q_ref.shape[0]                       # examples in this grid block

    # Packed torch-layout weight slab (4D, D); all slices are sublane-aligned
    # (offsets are multiples of 32 rows), no lane-axis extraction anywhere.
    wq = w_ref[0 * D:1 * D, :]
    wk = w_ref[1 * D:2 * D, :]
    wv = w_ref[2 * D:3 * D, :]
    wo = w_ref[3 * D:4 * D, :]

    # --- Q/K/V projections: fold the batch block into the matmul M dim ------
    # (bq, L, D) -> (bq*L, D) is a layout-preserving reshape (L is a multiple
    # of the 8-row sublane tile), so each projection is ONE wide MXU matmul.
    q2 = q_ref[...].reshape(bq * LQ, D)
    k2 = k_ref[...].reshape(bq * LK, D)
    v2 = v_ref[...].reshape(bq * LK, D)
    q = lax.dot_general(q2, wq, _TRANS_B,
                        preferred_element_type=jnp.float32).reshape(bq, LQ, D)
    k = lax.dot_general(k2, wk, _TRANS_B,
                        preferred_element_type=jnp.float32).reshape(bq, LK, D)
    v = lax.dot_general(v2, wv, _TRANS_B,
                        preferred_element_type=jnp.float32).reshape(bq, LK, D)

    # --- per-head scaled-dot-product attention (H tiny & static) ------------
    head_outs = []
    for h in range(NUM_ATTN_HEADS):
        lo, hi = h * ATTENTION_DIM, (h + 1) * ATTENTION_DIM
        qh, kh, vh = q[:, :, lo:hi], k[:, :, lo:hi], v[:, :, lo:hi]
        # q @ k^T per example without materializing kh.T.
        s = jnp.einsum("bqd,bkd->bqk", qh, kh,
                       preferred_element_type=jnp.float32) * SCALE
        s = s - jnp.max(s, axis=-1, keepdims=True)
        p = jnp.exp(s)
        p = p / jnp.sum(p, axis=-1, keepdims=True)        # exact divide
        head_outs.append(jnp.einsum("bqk,bkd->bqd", p, vh,
                                    preferred_element_type=jnp.float32))
    ctx = head_outs[0] if NUM_ATTN_HEADS == 1 else jnp.concatenate(head_outs, -1)

    # --- output projection (batch folded into M again, torch-layout Wo) -----
    out = lax.dot_general(ctx.reshape(bq * LQ, D), wo, _TRANS_B,
                          preferred_element_type=jnp.float32)
    o_ref[...] = out.reshape(bq, LQ, D)


def pack_weights(wq, wk, wv, wo):
    """One-time parameter-setup packing of the four torch (out,in) Linear
    weights into a single (4D, D) = (128, 32) slab (sublane/lane-tile sized)."""
    return jnp.concatenate([wq, wk, wv, wo], axis=0)


def attention_forward(query, key, value, w_qkvo, *, block_b=None):
    """query:(B,Lq,D)  key/value:(B,Lk,D)  w_qkvo:(4D,D) packed torch weights."""
    B = query.shape[0]
    if block_b is None:
        # ~6 KiB/example f32: even block_b=128 double-buffered stays well under
        # v5e's 16 MiB scoped-VMEM default, so no vmem_limit override is needed.
        block_b = min(B, 128)
    assert B % block_b == 0, (B, block_b)
    D = PROJ_DIM
    return pl.pallas_call(
        _attn_kernel,
        out_shape=jax.ShapeDtypeStruct((B, LQ, D), jnp.float32),
        grid_spec=pltpu.PrefetchScalarGridSpec(
            num_scalar_prefetch=0,
            grid=(B // block_b,),
            in_specs=[
                pl.BlockSpec((block_b, LQ, D), lambda b: (b, 0, 0)),
                pl.BlockSpec((block_b, LK, D), lambda b: (b, 0, 0)),
                pl.BlockSpec((block_b, LK, D), lambda b: (b, 0, 0)),
                # constant index_map -> weights DMA'd once, VMEM-resident
                pl.BlockSpec((4 * D, D), lambda b: (0, 0)),
            ],
            out_specs=pl.BlockSpec((block_b, LQ, D), lambda b: (b, 0, 0)),
        ),
        compiler_params=pltpu.CompilerParams(
            dimension_semantics=("parallel",)),   # both v7x TensorCores
    )(query, key, value, w_qkvo)


def _reference_single(query, key, value, wq, wk, wv, wo):
    """Accurate (HIGHEST precision) per-example reference of Model.forward."""
    hp = lax.Precision.HIGHEST
    q = jnp.dot(query, wq.T, precision=hp)
    k = jnp.dot(key, wk.T, precision=hp)
    v = jnp.dot(value, wv.T, precision=hp)
    q = q.reshape(-1, NUM_ATTN_HEADS, ATTENTION_DIM).transpose(1, 0, 2)
    k = k.reshape(-1, NUM_ATTN_HEADS, ATTENTION_DIM).transpose(1, 0, 2)
    v = v.reshape(-1, NUM_ATTN_HEADS, ATTENTION_DIM).transpose(1, 0, 2)
    s = jnp.einsum("hqa,hka->hqk", q, k, precision=hp) * SCALE
    p = jax.nn.softmax(s, axis=-1)
    o = jnp.einsum("hqk,hka->hqa", p, v, precision=hp)
    o = o.transpose(1, 0, 2).reshape(-1, PROJ_DIM)
    return jnp.dot(o, wo.T, precision=hp)


if __name__ == "__main__":
    rng = jax.random.PRNGKey(0)
    k_q, k_k, k_v, k_wq, k_wk, k_wv, k_wo = jax.random.split(rng, 7)

    B = 8   # batch of independent (q, k, v) example sets
    query = jax.random.normal(k_q, (B, LQ, PROJ_DIM), dtype=jnp.float32)
    key_ = jax.random.normal(k_k, (B, LK, PROJ_DIM), dtype=jnp.float32)
    value = jax.random.normal(k_v, (B, LK, PROJ_DIM), dtype=jnp.float32)

    w_init_range = 0.1
    wq = w_init_range * jax.random.normal(k_wq, (PROJ_DIM, PROJ_DIM), jnp.float32)
    wk = w_init_range * jax.random.normal(k_wk, (PROJ_DIM, PROJ_DIM), jnp.float32)
    wv = w_init_range * jax.random.normal(k_wv, (PROJ_DIM, PROJ_DIM), jnp.float32)
    wo = w_init_range * jax.random.normal(k_wo, (PROJ_DIM, PROJ_DIM), jnp.float32)

    w_qkvo = pack_weights(wq, wk, wv, wo)     # one-time parameter packing

    # block_b=4 -> grid=(2,): exercises the batched grid + resident weights.
    out = attention_forward(query, key_, value, w_qkvo, block_b=4)
    out = jax.block_until_ready(out)

    ref = jax.vmap(_reference_single,
                   in_axes=(0, 0, 0, None, None, None, None))(
        query, key_, value, wq, wk, wv, wo)

    assert out.shape == (B, LQ, PROJ_DIM)
    # Exact softmax divide restored; remaining tolerance only covers MXU f32
    # pass-decomposition rounding vs the HIGHEST-precision XLA reference.
    assert jnp.allclose(out, ref, atol=2e-4, rtol=2e-4), (
        float(jnp.max(jnp.abs(out - ref))))

    print("KERNEL_OK")
</pallas_src>

<mosaic_0001>
module attributes {stable_mosaic.version = 11 : i64} {
  func.func @_attn_kernel(%arg0: i32, %arg1: memref<4x8x32xf32, #tpu.memory_space<vmem>>, %arg2: memref<4x16x32xf32, #tpu.memory_space<vmem>>, %arg3: memref<4x16x32xf32, #tpu.memory_space<vmem>>, %arg4: memref<128x32xf32, #tpu.memory_space<vmem>>, %arg5: memref<4x8x32xf32, #tpu.memory_space<vmem>>) attributes {dimension_semantics = [#tpu.dimension_semantics<parallel>], iteration_bounds = array<i64: 2>, scalar_prefetch = 0 : i64, scratch_operands = 0 : i64, tpu.core_type = #tpu.core_type<tc>, window_params = [{transform_indices = @transform_0, window_bounds = array<i64: 4, 8, 32>}, {transform_indices = @transform_1, window_bounds = array<i64: 4, 16, 32>}, {transform_indices = @transform_2, window_bounds = array<i64: 4, 16, 32>}, {pipeline_mode = #tpu.pipeline_mode<synchronous>, transform_indices = @transform_3, window_bounds = array<i64: 128, 32>}, {transform_indices = @transform_4, window_bounds = array<i64: 4, 8, 32>}]} {
    %c0 = arith.constant 0 : index
    %c0_0 = arith.constant 0 : index
    %0 = vector.load %arg4[%c0, %c0_0] : memref<128x32xf32, #tpu.memory_space<vmem>>, vector<32x32xf32>
    %c32 = arith.constant 32 : index
    %c0_1 = arith.constant 0 : index
    %1 = vector.load %arg4[%c32, %c0_1] : memref<128x32xf32, #tpu.memory_space<vmem>>, vector<32x32xf32>
    %c64 = arith.constant 64 : index
    %c0_2 = arith.constant 0 : index
    %2 = vector.load %arg4[%c64, %c0_2] : memref<128x32xf32, #tpu.memory_space<vmem>>, vector<32x32xf32>
    %c96 = arith.constant 96 : index
    %c0_3 = arith.constant 0 : index
    %3 = vector.load %arg4[%c96, %c0_3] : memref<128x32xf32, #tpu.memory_space<vmem>>, vector<32x32xf32>
    %c0_4 = arith.constant 0 : index
    %c0_5 = arith.constant 0 : index
    %c0_6 = arith.constant 0 : index
    %4 = vector.load %arg1[%c0_4, %c0_5, %c0_6] : memref<4x8x32xf32, #tpu.memory_space<vmem>>, vector<4x8x32xf32>
    %5 = vector.shape_cast %4 : vector<4x8x32xf32> to vector<32x32xf32>
    %c0_7 = arith.constant 0 : index
    %c0_8 = arith.constant 0 : index
    %c0_9 = arith.constant 0 : index
    %6 = vector.load %arg2[%c0_7, %c0_8, %c0_9] : memref<4x16x32xf32, #tpu.memory_space<vmem>>, vector<4x16x32xf32>
    %7 = vector.shape_cast %6 : vector<4x16x32xf32> to vector<64x32xf32>
    %c0_10 = arith.constant 0 : index
    %c0_11 = arith.constant 0 : index
    %c0_12 = arith.constant 0 : index
    %8 = vector.load %arg3[%c0_10, %c0_11, %c0_12] : memref<4x16x32xf32, #tpu.memory_space<vmem>>, vector<4x16x32xf32>
    %9 = vector.shape_cast %8 : vector<4x16x32xf32> to vector<64x32xf32>
    %cst = arith.constant dense<0.000000e+00> : vector<32x32xf32>
    %10 = tpu.matmul %5, %0, %cst {dimension_numbers = #tpu.dot_dimension_numbers<[1], [1], [0], [0], [0, 0, 1, 0], [], []>} : vector<32x32xf32>, vector<32x32xf32>, vector<32x32xf32> -> vector<32x32xf32>
    %11 = vector.shape_cast %10 : vector<32x32xf32> to vector<4x8x32xf32>
    %cst_13 = arith.constant dense<0.000000e+00> : vector<64x32xf32>
    %12 = tpu.matmul %7, %1, %cst_13 {dimension_numbers = #tpu.dot_dimension_numbers<[1], [1], [0], [0], [0, 0, 1, 0], [], []>} : vector<64x32xf32>, vector<32x32xf32>, vector<64x32xf32> -> vector<64x32xf32>
    %13 = vector.shape_cast %12 : vector<64x32xf32> to vector<4x16x32xf32>
    %cst_14 = arith.constant dense<0.000000e+00> : vector<64x32xf32>
    %14 = tpu.matmul %9, %2, %cst_14 {dimension_numbers = #tpu.dot_dimension_numbers<[1], [1], [0], [0], [0, 0, 1, 0], [], []>} : vector<64x32xf32>, vector<32x32xf32>, vector<64x32xf32> -> vector<64x32xf32>
    %15 = vector.shape_cast %14 : vector<64x32xf32> to vector<4x16x32xf32>
    "tpu.trace_start"() <{level = 10 : i32, message = "bqd,bkd->bqk"}> : () -> ()
    %cst_15 = arith.constant dense<0.000000e+00> : vector<4x8x16xf32>
    %16 = tpu.matmul %11, %13, %cst_15 {dimension_numbers = #tpu.dot_dimension_numbers<[2], [2], [1], [1], [0, 0, 0, 1, 1, 1], [0], [0]>} : vector<4x8x32xf32>, vector<4x16x32xf32>, vector<4x8x16xf32> -> vector<4x8x16xf32>
    "tpu.trace_stop"() : () -> ()
    %cst_16 = arith.constant 0.176776692 : f32
    %17 = vector.broadcast %cst_16 : f32 to vector<4x8x16xf32>
    %18 = arith.mulf %16, %17 : vector<4x8x16xf32>
    %cst_17 = arith.constant dense<0xFF800000> : vector<4x8xf32>
    %19 = vector.multi_reduction <maximumf>, %18, %cst_17 [2] : vector<4x8x16xf32> to vector<4x8xf32>
    %20 = vector.shape_cast %19 : vector<4x8xf32> to vector<4x8x1xf32>
    %21 = vector.broadcast %20 : vector<4x8x1xf32> to vector<4x8x16xf32>
    %22 = arith.subf %18, %21 : vector<4x8x16xf32>
    %23 = math.exp %22 : vector<4x8x16xf32>
    %cst_18 = arith.constant dense<0.000000e+00> : vector<4x8xf32>
    %24 = vector.multi_reduction <add>, %23, %cst_18 [2] : vector<4x8x16xf32> to vector<4x8xf32>
    %25 = vector.shape_cast %24 : vector<4x8xf32> to vector<4x8x1xf32>
    %26 = vector.broadcast %25 : vector<4x8x1xf32> to vector<4x8x16xf32>
    %27 = arith.divf %23, %26 : vector<4x8x16xf32>
    "tpu.trace_start"() <{level = 10 : i32, message = "bqk,bkd->bqd"}> : () -> ()
    %cst_19 = arith.constant dense<0.000000e+00> : vector<4x8x32xf32>
    %28 = tpu.matmul %27, %15, %cst_19 {dimension_numbers = #tpu.dot_dimension_numbers<[2], [1], [1], [2], [0, 0, 0, 1, 1, 2], [0], [0]>} : vector<4x8x16xf32>, vector<4x16x32xf32>, vector<4x8x32xf32> -> vector<4x8x32xf32>
    "tpu.trace_stop"() : () -> ()
    %29 = vector.shape_cast %28 : vector<4x8x32xf32> to vector<32x32xf32>
    %cst_20 = arith.constant dense<0.000000e+00> : vector<32x32xf32>
    %30 = tpu.matmul %29, %3, %cst_20 {dimension_numbers = #tpu.dot_dimension_numbers<[1], [1], [0], [0], [0, 0, 1, 0], [], []>} : vector<32x32xf32>, vector<32x32xf32>, vector<32x32xf32> -> vector<32x32xf32>
    %31 = vector.shape_cast %30 : vector<32x32xf32> to vector<4x8x32xf32>
    %c0_21 = arith.constant 0 : index
    %c0_22 = arith.constant 0 : index
    %c0_23 = arith.constant 0 : index
    %32 = vector.load %arg5[%c0_21, %c0_22, %c0_23] : memref<4x8x32xf32, #tpu.memory_space<vmem>>, vector<4x8x32xf32>
    tpu.vector_store %arg5[%c0_21, %c0_22, %c0_23], %31 {strides = array<i32>} : memref<4x8x32xf32, #tpu.memory_space<vmem>>, vector<4x8x32xf32>,
    return
  }
  func.func @transform_0(%arg0: i32) -> (i32, i32, i32) {
    %c0_i32 = arith.constant 0 : i32
    %c0_i32_0 = arith.constant 0 : i32
    %c0_i32_1 = arith.constant 0 : i32
    return %arg0, %c0_i32, %c0_i32_0 : i32, i32, i32
  }
  func.func @transform_1(%arg0: i32) -> (i32, i32, i32) {
    %c0_i32 = arith.constant 0 : i32
    %c0_i32_0 = arith.constant 0 : i32
    %c0_i32_1 = arith.constant 0 : i32
    return %arg0, %c0_i32, %c0_i32_0 : i32, i32, i32
  }
  func.func @transform_2(%arg0: i32) -> (i32, i32, i32) {
    %c0_i32 = arith.constant 0 : i32
    %c0_i32_0 = arith.constant 0 : i32
    %c0_i32_1 = arith.constant 0 : i32
    return %arg0, %c0_i32, %c0_i32_0 : i32, i32, i32
  }
  func.func @transform_3(%arg0: i32) -> (i32, i32) {
    %c0_i32 = arith.constant 0 : i32
    %c0_i32_0 = arith.constant 0 : i32
    %c0_i32_1 = arith.constant 0 : i32
    return %c0_i32, %c0_i32_0 : i32, i32
  }
  func.func @transform_4(%arg0: i32) -> (i32, i32, i32) {
    %c0_i32 = arith.constant 0 : i32
    %c0_i32_0 = arith.constant 0 : i32
    %c0_i32_1 = arith.constant 0 : i32
    return %arg0, %c0_i32, %c0_i32_0 : i32, i32, i32
  }
}

</mosaic_0001>

<llo_original>
// kernel: tpu_custom_call.1
$region0: #{tpu_custom_call.1}
  #allocation0 [shape = 'u32[]', space=smem, size = 0x4, offset = 0x4, fixed_abs, tag = 'smem constant byte address 0x4 - core index']
  #allocation1 [shape = 'u32[72,128]{1,0:T(1,128)}', space=vmem, size = 0x9000, scoped, tag = 'internal scratch']
  %s0 = inlined_call_operand.hbm [shape: f32[8,8,32], index: 0, kind: input, shape index: {}]
  %s1 = inlined_call_operand.vmem [shape: f32[8,16,32], index: 1, kind: input, shape index: {}]
  %s2 = inlined_call_operand.hbm [shape: f32[8,16,32], index: 2, kind: input, shape index: {}]
  %s3 = inlined_call_operand.vmem [shape: f32[128,32], index: 3, kind: input, shape index: {}]
  %s4 = inlined_call_operand.hbm [shape: f32[8,8,32], index: 4, kind: output, shape index: {}]
  %s5 = sld [smem:[#allocation0]]
  $region57: #{tpu_custom_call.1} parent=0
    _
  %s7 = ssub.s32 1, %s5
  %s8 = scalar_select 0, %s7, %s5
  $region1: #{tpu_custom_call.1} parent=0
    #allocation2 [shape = 'u8[32768]{0}', space=vmem, size = 0x8000, scoped, tag = 'input window, operand 0']
    #allocation3 [shape = 's32[2]{0}', space=sflag, size = 0x8, scoped, tag = 'scoped memory for tpu_custom_call.1']
    #allocation4 [shape = 's32[2]{0}', space=sflag, size = 0x8, scoped, tag = 'scoped memory for tpu_custom_call.1']
    #allocation5 [shape = 'u8[65536]{0}', space=vmem, size = 0x10000, scoped, tag = 'input window, operand 2']
    #allocation6 [shape = 's32[2]{0}', space=sflag, size = 0x8, scoped, tag = 'scoped memory for tpu_custom_call.1']
    #allocation7 [shape = 'u8[32768]{0}', space=vmem, size = 0x8000, scoped, tag = 'output window, operand 0']
    %9 = vsyncpa [#allocation3], 0
    %s10 = scalar_lea.sflag [#allocation3], 1
    %11 = vsyncpa %s10, 0
    %12 = vsyncpa [#allocation6], 0
    %s13 = scalar_lea.sflag [#allocation6], 1
    %14 = vsyncpa %s13, 0
    %15 = vsyncpa [#allocation4], 0
    %s16 = scalar_lea.sflag [#allocation4], 1
    %17 = vsyncpa %s16, 0
    loop: start=0, step=1, limit=4
    $region2: #{tpu_custom_call.1} parent=1 // loop_pre_header
      _
    $region3: #{tpu_custom_call.1} parent=1 // loop_header
      %s19 = sphi 0, %s23
      %p20 = scmp.ge.s32.totalorder %s19, 4
      %s29 = sphi 0, %s31
      %s32 = sphi 0, %s29
      %s33 = sphi 0, %s32
      %s49 = sphi 0, %s33
      %s55 = sphi 0, %s57
      %s58 = sphi 0, %s55
      %s59 = sphi 0, %s58
      %s75 = sphi 0, %s59
      %s81 = sphi 0, %s83
      %s84 = sphi 0, %s81
      %s85 = sphi 0, %s84
      %s101 = sphi 0, %s85
      %s105 = sphi 0, %s105
      %s107 = sphi 0, %s105
      %s108 = sphi 0, %s107
      %s122 = sphi 0, %s108
      %s128 = sphi 0, %s130
      %s131 = sphi 0, %s128
      %s132 = sphi 0, %s131
      %s148 = sphi 0, %s132
    $region4: #{tpu_custom_call.1} parent=1 // loop_header_branch
      %22 = sbr.rel (%p20) target = $region8
    $region5: #{tpu_custom_call.1} parent=1 // loop_body
      %s24 = ssub.s32 %s19, 1
      %s25 = ssub.s32 %s19, 2
      %s26 = sadd.s32 %s19, 1
      %s27 = ssub.s32 %s19, %s26
      %p28 = scmp.eq.s32.totalorder %s27, 0
      %s30 = sadd.s32 %s29, 1
      %s31 = scalar_select %p28, %s29, %s30
      %p34 = pneg %p28
      %p35 = scmp.eq.s32.totalorder %s19, 1
      %p36 = por %p34, %p35
      %p37 = scmp.ne.s32.totalorder %s29, %s32
      %p38 = scmp.eq.s32.totalorder %s19, 0
      %p39 = por %p37, %p38
      %p40 = scmp.ne.s32.totalorder %s29, %s32
      %p41 = scmp.eq.s32.totalorder %s24, 1
      %p42 = por %p40, %p41
      %p43 = scmp.ne.s32.totalorder %s32, %s33
      %p44 = scmp.eq.s32.totalorder %s24, 0
      %p45 = por %p43, %p44
      %p46 = scmp.ne.s32.totalorder %s32, %s33
      %p47 = scmp.eq.s32.totalorder %s25, 1
      %p48 = por %p46, %p47
      %p50 = scmp.ne.s32.totalorder %s33, %s49
      %p51 = scmp.eq.s32.totalorder %s25, 0
      %p52 = por %p50, %p51
      %s53 = ssub.s32 %s19, %s26
      %p54 = scmp.eq.s32.totalorder %s53, 0
      %s56 = sadd.s32 %s55, 1
      %s57 = scalar_select %p54, %s55, %s56
      %p60 = pneg %p54
      %p61 = scmp.eq.s32.totalorder %s19, 1
      %p62 = por %p60, %p61
      %p63 = scmp.ne.s32.totalorder %s55, %s58
      %p64 = scmp.eq.s32.totalorder %s19, 0
      %p65 = por %p63, %p64
      %p66 = scmp.ne.s32.totalorder %s55, %s58
      %p67 = scmp.eq.s32.totalorder %s24, 1
      %p68 = por %p66, %p67
      %p69 = scmp.ne.s32.totalorder %s58, %s59
      %p70 = scmp.eq.s32.totalorder %s24, 0
      %p71 = por %p69, %p70
      %p72 = scmp.ne.s32.totalorder %s58, %s59
      %p73 = scmp.eq.s32.totalorder %s25, 1
      %p74 = por %p72, %p73
      %p76 = scmp.ne.s32.totalorder %s59, %s75
      %p77 = scmp.eq.s32.totalorder %s25, 0
      %p78 = por %p76, %p77
      %s79 = ssub.s32 %s19, %s26
      %p80 = scmp.eq.s32.totalorder %s79, 0
      %s82 = sadd.s32 %s81, 1
      %s83 = scalar_select %p80, %s81, %s82
      %p86 = pneg %p80
      %p87 = scmp.eq.s32.totalorder %s19, 1
      %p88 = por %p86, %p87
      %p89 = scmp.ne.s32.totalorder %s81, %s84
      %p90 = scmp.eq.s32.totalorder %s19, 0
      %p91 = por %p89, %p90
      %p92 = scmp.ne.s32.totalorder %s81, %s84
      %p93 = scmp.eq.s32.totalorder %s24, 1
      %p94 = por %p92, %p93
      %p95 = scmp.ne.s32.totalorder %s84, %s85
      %p96 = scmp.eq.s32.totalorder %s24, 0
      %p97 = por %p95, %p96
      %p98 = scmp.ne.s32.totalorder %s84, %s85
      %p99 = scmp.eq.s32.totalorder %s25, 1
      %p100 = por %p98, %p99
      %p102 = scmp.ne.s32.totalorder %s85, %s101
      %p103 = scmp.eq.s32.totalorder %s25, 0
      %p104 = por %p102, %p103
      %s106 = sadd.s32 %s105, 1
      %p109 = scmp.eq.s32.totalorder %s19, 1
      %p110 = scmp.ne.s32.totalorder %s105, %s107
      %p111 = scmp.eq.s32.totalorder %s19, 0
      %p112 = por %p110, %p111
      %p113 = scmp.ne.s32.totalorder %s105, %s107
      %p114 = scmp.eq.s32.totalorder %s24, 1
      %p115 = por %p113, %p114
      %p116 = scmp.ne.s32.totalorder %s107, %s108
      %p117 = scmp.eq.s32.totalorder %s24, 0
      %p118 = por %p116, %p117
      %p119 = scmp.ne.s32.totalorder %s107, %s108
      %p120 = scmp.eq.s32.totalorder %s25, 1
      %p121 = por %p119, %p120
      %p123 = scmp.ne.s32.totalorder %s108, %s122
      %p124 = scmp.eq.s32.totalorder %s25, 0
      %p125 = por %p123, %p124
      %s126 = ssub.s32 %s19, %s26
      %p127 = scmp.eq.s32.totalorder %s126, 0
      %s129 = sadd.s32 %s128, 1
      %s130 = scalar_select %p127, %s128, %s129
      %p133 = pneg %p127
      %p134 = scmp.eq.s32.totalorder %s19, 1
      %p135 = por %p133, %p134
      %p136 = scmp.ne.s32.totalorder %s128, %s131
      %p137 = scmp.eq.s32.totalorder %s19, 0
      %p138 = por %p136, %p137
      %p139 = scmp.ne.s32.totalorder %s128, %s131
      %p140 = scmp.eq.s32.totalorder %s24, 1
      %p141 = por %p139, %p140
      %p142 = scmp.ne.s32.totalorder %s131, %s132
      %p143 = scmp.eq.s32.totalorder %s24, 0
      %p144 = por %p142, %p143
      %p145 = scmp.ne.s32.totalorder %s131, %s132
      %p146 = scmp.eq.s32.totalorder %s25, 1
      %p147 = por %p145, %p146
      %p149 = scmp.ne.s32.totalorder %s132, %s148
      %p150 = scmp.eq.s32.totalorder %s25, 0
      %p151 = por %p149, %p150
      %p152 = scmp.le.s32.totalorder 1, %s19
      %p153 = scmp.lt.s32.totalorder %s19, 3
      %p154 = pnand %p152, %p153
      %p155 = pneg %p154
      // Predicated region
      $region9: #{tpu_custom_call.1} parent=5 // pred_check
        _
      $region10: #{tpu_custom_call.1} parent=5 // pred_check_branch
        %157 = sbr.rel (%p154) target = $region12
      $region11: #{tpu_custom_call.1} parent=5 // pred_region
        %s158 = ssub.s32 %s19, 1
        // Predicated region
        $region13: #{tpu_custom_call.1} parent=11 // pred_check
          %p159 = pneg %p118
        $region14: #{tpu_custom_call.1} parent=11 // pred_check_branch
          %161 = sbr.rel (%p159) target = $region16
        $region15: #{tpu_custom_call.1} parent=11 // pred_region
          _
        $region16: #{tpu_custom_call.1} parent=11 // pred_fallthru
          _
      $region12: #{tpu_custom_call.1} parent=5 // pred_fallthru
        _
      %p162 = scmp.lt.s32.totalorder %s19, 2
      // Predicated region
      $region17: #{tpu_custom_call.1} parent=5 // pred_check
        %p163 = pneg %p162
      $region18: #{tpu_custom_call.1} parent=5 // pred_check_branch
        %165 = sbr.rel (%p163) target = $region20
      $region19: #{tpu_custom_call.1} parent=5 // pred_region
        // Predicated region
        $region21: #{tpu_custom_call.1} parent=19 // pred_check
          %p166 = pneg %p39
        $region22: #{tpu_custom_call.1} parent=19 // pred_check_branch
          %168 = sbr.rel (%p166) target = $region24
        $region23: #{tpu_custom_call.1} parent=19 // pred_region
          %s169 = sand.u32 %s29, 1
          %s170 = scalar_lea.sflag [#allocation3], %s169
          %s171 = sand.u32 %s29, 1
          %s172 = smul.addr %s171, 32
          %s173 = scalar_lea.vmem [#allocation2], %s172
          %s174 = smul.u32 4, %s19
          %176 = vsyncadd %s170, 0
          %s177 = smul.addr %s174, 8
          %s178 = scalar_lea.hbm %s0, %s177
          %s179 = sshll.u32 %s178, 4
          %s180 = int_to_ptr.hbm [resolvable:$true] %s179
          %s181 = sshll.u32 %s173, 4
          %s182 = int_to_ptr.vmem [resolvable:$true] %s181
          %187 = dma.hbm_to_vmem [thread:$0]  %s180, 512, %s182, %s170, 128, 128, 8
        $region24: #{tpu_custom_call.1} parent=19 // pred_fallthru
          _
        // Predicated region
        $region25: #{tpu_custom_call.1} parent=19 // pred_check
          %p188 = pneg %p65
        $region26: #{tpu_custom_call.1} parent=19 // pred_check_branch
          %190 = sbr.rel (%p188) target = $region28
        $region27: #{tpu_custom_call.1} parent=19 // pred_region
          %s191 = smul.u32 4, %s19
          %p192 = scmp.lt.s32.totalorder %s191, 7
          %s193 = scalar_select %p192, %s191, 7
          %s194 = smul.addr %s193, 2
          %s195 = smul.addr %s194, 8
          %s196 = scalar_lea.vmem %s1, %s195
          %s197 = smul.u32 4, %s19
        $region28: #{tpu_custom_call.1} parent=19 // pred_fallthru
          _
        // Predicated region
        $region29: #{tpu_custom_call.1} parent=19 // pred_check
          %p198 = pneg %p91
        $region30: #{tpu_custom_call.1} parent=19 // pred_check_branch
          %200 = sbr.rel (%p198) target = $region32
        $region31: #{tpu_custom_call.1} parent=19 // pred_region
          %s201 = sand.u32 %s81, 1
          %s202 = scalar_lea.sflag [#allocation6], %s201
          %s203 = sand.u32 %s81, 1
          %s204 = smul.addr %s203, 64
          %s205 = scalar_lea.vmem [#allocation5], %s204
          %s206 = smul.u32 4, %s19
          %208 = vsyncadd %s202, 0
          %s209 = smul.addr %s206, 2
          %s210 = smul.addr %s209, 8
          %s211 = scalar_lea.hbm %s2, %s210
          %s212 = sshll.u32 %s211, 4
          %s213 = int_to_ptr.hbm [resolvable:$true] %s212
          %s214 = sshll.u32 %s205, 4
          %s215 = int_to_ptr.vmem [resolvable:$true] %s214
          %220 = dma.hbm_to_vmem [thread:$0]  %s213, 1024, %s215, %s202, 128, 128, 8
        $region32: #{tpu_custom_call.1} parent=19 // pred_fallthru
          _
      $region20: #{tpu_custom_call.1} parent=5 // pred_fallthru
        _
      %p221 = scmp.le.s32.totalorder 1, %s19
      %p222 = scmp.lt.s32.totalorder %s19, 3
      %p223 = pnand %p221, %p222
      %p224 = pneg %p223
      // Predicated region
      $region33: #{tpu_custom_call.1} parent=5 // pred_check
        _
      $region34: #{tpu_custom_call.1} parent=5 // pred_check_branch
        %226 = sbr.rel (%p223) target = $region36
      $region35: #{tpu_custom_call.1} parent=5 // pred_region
        %s227 = ssub.s32 %s19, 1
        %s228 = sand.u32 %s32, 1
        %s229 = scalar_lea.sflag [#allocation3], %s228
        %s230 = sand.u32 %s32, 1
        %s231 = smul.addr %s230, 32
        %s232 = scalar_lea.vmem [#allocation2], %s231
        // Predicated region
        $region37: #{tpu_custom_call.1} parent=35 // pred_check
          %p233 = pneg %p45
        $region38: #{tpu_custom_call.1} parent=35 // pred_check_branch
          %235 = sbr.rel (%p233) target = $region40
        $region39: #{tpu_custom_call.1} parent=35 // pred_region
          %237 = dma.done %s229, 512
        $region40: #{tpu_custom_call.1} parent=35 // pred_fallthru
          _
        %s238 = sand.u32 %s84, 1
        %s239 = scalar_lea.sflag [#allocation6], %s238
        %s240 = sand.u32 %s84, 1
        %s241 = smul.addr %s240, 64
        %s242 = scalar_lea.vmem [#allocation5], %s241
        // Predicated region
        $region41: #{tpu_custom_call.1} parent=35 // pred_check
          %p243 = pneg %p97
        $region42: #{tpu_custom_call.1} parent=35 // pred_check_branch
          %245 = sbr.rel (%p243) target = $region44
        $region43: #{tpu_custom_call.1} parent=35 // pred_region
          %247 = dma.done %s239, 1024
        $region44: #{tpu_custom_call.1} parent=35 // pred_fallthru
          _
        %s248 = sand.u32 %s32, 1
        %s249 = scalar_lea.sflag [#allocation3], %s248
        %s250 = sand.u32 %s32, 1
        %s251 = smul.addr %s250, 32
        %s252 = scalar_lea.vmem [#allocation2], %s251
        %p253 = pneg %p45
        %p254 = pneg %p42
        %s255 = smul.u32 4, %s24
        %p256 = scmp.lt.s32.totalorder %s255, 7
        %s257 = scalar_select %p256, %s255, 7
        %s258 = smul.addr %s257, 2
        %s259 = smul.addr %s258, 8
        %s260 = scalar_lea.vmem %s1, %s259
        %p261 = pneg %p71
        %p262 = pneg %p68
        %s263 = sand.u32 %s84, 1
        %s264 = scalar_lea.sflag [#allocation6], %s263
        %s265 = sand.u32 %s84, 1
        %s266 = smul.addr %s265, 64
        %s267 = scalar_lea.vmem [#allocation5], %s266
        %p268 = pneg %p97
        %p269 = pneg %p94
        %p270 = pneg %p118
        %p271 = pneg %p115
        %p272 = pneg %p144
        %p273 = pneg %p141
        %s274 = sand.u32 %s131, 1
        %s275 = scalar_lea.sflag [#allocation4], %s274
        %s276 = sand.u32 %s131, 1
        %s277 = smul.addr %s276, 32
        %s278 = scalar_lea.vmem [#allocation7], %s277
        %s279 = smul.u32 4, %s24
        %s280 = smul.u32 4, %s24
        %p281 = scmp.lt.s32.totalorder %s280, 7
        %s282 = scalar_select %p281, %s280, 7
        %s283 = smul.addr %s282, 2
        %s284 = smul.addr %s283, 8
        %s285 = scalar_lea.vmem %s1, %s284
        %s286 = smul.u32 4, %s24
        %s287 = smul.u32 4, %s24
        %s288 = smul.u32 4, %s24
        %v289 = vld [vmem:[%s3] sm:$0xff]
        %v290 = vld [vmem:[%s3 + $0x8] sm:$0xff]
        %v291 = vld [vmem:[%s3 + $0x10] sm:$0xff]
        %v292 = vld [vmem:[%s3 + $0x18] sm:$0xff]
        %v293 = vld [vmem:[%s3 + $0x20] sm:$0xff]
        %v294 = vld [vmem:[%s3 + $0x28] sm:$0xff]
        %v295 = vld [vmem:[%s3 + $0x30] sm:$0xff]
        %v296 = vld [vmem:[%s3 + $0x38] sm:$0xff]
        %v297 = vld [vmem:[%s3 + $0x40] sm:$0xff]
        %v298 = vld [vmem:[%s3 + $0x48] sm:$0xff]
        %v299 = vld [vmem:[%s3 + $0x50] sm:$0xff]
        %v300 = vld [vmem:[%s3 + $0x58] sm:$0xff]
        %v301 = vld [vmem:[%s3 + $0x60] sm:$0xff]
        %v302 = vld [vmem:[%s3 + $0x68] sm:$0xff]
        %v303 = vld [vmem:[%s3 + $0x70] sm:$0xff]
        %v304 = vld [vmem:[%s3 + $0x78] sm:$0xff]
        %v305 = vld [vmem:[%s232] sm:$0xff]
        %v306 = vld [vmem:[%s232 + $0x8] sm:$0xff]
        %v307 = vld [vmem:[%s232 + $0x10] sm:$0xff]
        %v308 = vld [vmem:[%s232 + $0x18] sm:$0xff]
        %v309 = vld [vmem:[%s285] sm:$0xff]
        %v310 = vld [vmem:[%s285 + $0x8] sm:$0xff]
        %v311 = vld [vmem:[%s285 + $0x10] sm:$0xff]
        %v312 = vld [vmem:[%s285 + $0x18] sm:$0xff]
        %v313 = vld [vmem:[%s285 + $0x20] sm:$0xff]
        %v314 = vld [vmem:[%s285 + $0x28] sm:$0xff]
        %v315 = vld [vmem:[%s285 + $0x30] sm:$0xff]
        %v316 = vld [vmem:[%s285 + $0x38] sm:$0xff]
        %v317 = vld [vmem:[%s242] sm:$0xff]
        %v318 = vld [vmem:[%s242 + $0x8] sm:$0xff]
        %v319 = vld [vmem:[%s242 + $0x10] sm:$0xff]
        %v320 = vld [vmem:[%s242 + $0x18] sm:$0xff]
        %v321 = vld [vmem:[%s242 + $0x20] sm:$0xff]
        %v322 = vld [vmem:[%s242 + $0x28] sm:$0xff]
        %v323 = vld [vmem:[%s242 + $0x30] sm:$0xff]
        %v324 = vld [vmem:[%s242 + $0x38] sm:$0xff]
        %vm325 = vcmask 261120
        %v327 = vsel %vm325, %v305, 0
        %v330 = vsel %vm325, %v306, 0
        %v333 = vsel %vm325, %v307, 0
        %v336 = vsel %vm325, %v308, 0
        %v339 = vsel %vm325, %v289, 0
        %v342 = vsel %vm325, %v290, 0
        %v345 = vsel %vm325, %v291, 0
        %v348 = vsel %vm325, %v292, 0
        %350 = vmatpush.xpose.msra.mxu0 0.0
        %351 = vmatpush.xpose.msra.mxu0 0.0
        %352 = vmatpush.xpose.msra.mxu0 0.0
        %353 = vmatpush.xpose.msra.mxu0 0.0
        %354 = vmatpush.xpose.msra.mxu0 0.0
        %355 = vmatpush.xpose.msra.mxu0 0.0
        %356 = vmatpush.xpose.msra.mxu0 0.0
        %357 = vmatpush.xpose.msra.mxu0 0.0
        %358 = vmatpush.xpose.msra.mxu0 0.0
        %359 = vmatpush.xpose.msra.mxu0 0.0
        %360 = vmatpush.xpose.msra.mxu0 0.0
        %361 = vmatpush.xpose.msra.mxu0 0.0
        %362 = vmatpush.xpose.msra.mxu0 %v348
        %363 = vmatpush.xpose.msra.mxu0 %v345
        %364 = vmatpush.xpose.msra.mxu0 %v342
        %365 = vmatpush.xpose.msra.mxu0 %v339
        %366 = vmatmul.f32.gmra.mxu0 %v327
        %v367 = vpop.f32.mrf.mxu0
        %v368 = vadd.f32 0.0, %v367
        %369 = vmatmul.f32.gmra.mxu0 %v330
        %v370 = vpop.f32.mrf.mxu0
        %v371 = vadd.f32 0.0, %v370
        %372 = vmatmul.f32.gmra.mxu0 %v333
        %v373 = vpop.f32.mrf.mxu0
        %v374 = vadd.f32 0.0, %v373
        %375 = vmatmul.f32.gmra.mxu0 %v336
        %v376 = vpop.f32.mrf.mxu0
        %v377 = vadd.f32 0.0, %v376
        %378 = vdwg.mxu0
        %v380 = vsel %vm325, %v309, 0
        %v383 = vsel %vm325, %v310, 0
        %v386 = vsel %vm325, %v311, 0
        %v389 = vsel %vm325, %v312, 0
        %v392 = vsel %vm325, %v313, 0
        %v395 = vsel %vm325, %v314, 0
        %v398 = vsel %vm325, %v315, 0
        %v401 = vsel %vm325, %v316, 0
        %v404 = vsel %vm325, %v293, 0
        %v407 = vsel %vm325, %v294, 0
        %v410 = vsel %vm325, %v295, 0
        %v413 = vsel %vm325, %v296, 0
        %415 = vmatpush.xpose.msra.mxu0 0.0
        %416 = vmatpush.xpose.msra.mxu0 0.0
        %417 = vmatpush.xpose.msra.mxu0 0.0
        %418 = vmatpush.xpose.msra.mxu0 0.0
        %419 = vmatpush.xpose.msra.mxu0 0.0
        %420 = vmatpush.xpose.msra.mxu0 0.0
        %421 = vmatpush.xpose.msra.mxu0 0.0
        %422 = vmatpush.xpose.msra.mxu0 0.0
        %423 = vmatpush.xpose.msra.mxu0 0.0
        %424 = vmatpush.xpose.msra.mxu0 0.0
        %425 = vmatpush.xpose.msra.mxu0 0.0
        %426 = vmatpush.xpose.msra.mxu0 0.0
        %427 = vmatpush.xpose.msra.mxu0 %v413
        %428 = vmatpush.xpose.msra.mxu0 %v410
        %429 = vmatpush.xpose.msra.mxu0 %v407
        %430 = vmatpush.xpose.msra.mxu0 %v404
        %431 = vmatmul.f32.gmra.mxu0 %v380
        %v432 = vpop.f32.mrf.mxu0
        %v433 = vadd.f32 0.0, %v432
        %434 = vmatmul.f32.gmra.mxu0 %v383
        %v435 = vpop.f32.mrf.mxu0
        %v436 = vadd.f32 0.0, %v435
        %437 = vmatmul.f32.gmra.mxu0 %v386
        %v438 = vpop.f32.mrf.mxu0
        %v439 = vadd.f32 0.0, %v438
        %440 = vmatmul.f32.gmra.mxu0 %v389
        %v441 = vpop.f32.mrf.mxu0
        %v442 = vadd.f32 0.0, %v441
        %443 = vmatmul.f32.gmra.mxu0 %v392
        %v444 = vpop.f32.mrf.mxu0
        %v445 = vadd.f32 0.0, %v444
        %446 = vmatmul.f32.gmra.mxu0 %v395
        %v447 = vpop.f32.mrf.mxu0
        %v448 = vadd.f32 0.0, %v447
        %449 = vmatmul.f32.gmra.mxu0 %v398
        %v450 = vpop.f32.mrf.mxu0
        %v451 = vadd.f32 0.0, %v450
        %452 = vmatmul.f32.gmra.mxu0 %v401
        %v453 = vpop.f32.mrf.mxu0
        %v454 = vadd.f32 0.0, %v453
        %455 = vdwg.mxu0
        %v457 = vsel %vm325, %v317, 0
        %v460 = vsel %vm325, %v318, 0
        %v463 = vsel %vm325, %v319, 0
        %v466 = vsel %vm325, %v320, 0
        %v469 = vsel %vm325, %v321, 0
        %v472 = vsel %vm325, %v322, 0
        %v475 = vsel %vm325, %v323, 0
        %v478 = vsel %vm325, %v324, 0
        %v481 = vsel %vm325, %v297, 0
        %v484 = vsel %vm325, %v298, 0
        %v487 = vsel %vm325, %v299, 0
        %v490 = vsel %vm325, %v300, 0
        %492 = vmatpush.xpose.msra.mxu0 0.0
        %493 = vmatpush.xpose.msra.mxu0 0.0
        %494 = vmatpush.xpose.msra.mxu0 0.0
        %495 = vmatpush.xpose.msra.mxu0 0.0
        %496 = vmatpush.xpose.msra.mxu0 0.0
        %497 = vmatpush.xpose.msra.mxu0 0.0
        %498 = vmatpush.xpose.msra.mxu0 0.0
        %499 = vmatpush.xpose.msra.mxu0 0.0
        %500 = vmatpush.xpose.msra.mxu0 0.0
        %501 = vmatpush.xpose.msra.mxu0 0.0
        %502 = vmatpush.xpose.msra.mxu0 0.0
        %503 = vmatpush.xpose.msra.mxu0 0.0
        %504 = vmatpush.xpose.msra.mxu0 %v490
        %505 = vmatpush.xpose.msra.mxu0 %v487
        %506 = vmatpush.xpose.msra.mxu0 %v484
        %507 = vmatpush.xpose.msra.mxu0 %v481
        %508 = vmatmul.f32.gmra.mxu0 %v457
        %v509 = vpop.f32.mrf.mxu0
        %v510 = vadd.f32 0.0, %v509
        %511 = vmatmul.f32.gmra.mxu0 %v460
        %v512 = vpop.f32.mrf.mxu0
        %v513 = vadd.f32 0.0, %v512
        %514 = vmatmul.f32.gmra.mxu0 %v463
        %v515 = vpop.f32.mrf.mxu0
        %v516 = vadd.f32 0.0, %v515
        %517 = vmatmul.f32.gmra.mxu0 %v466
        %v518 = vpop.f32.mrf.mxu0
        %v519 = vadd.f32 0.0, %v518
        %520 = vmatmul.f32.gmra.mxu0 %v469
        %v521 = vpop.f32.mrf.mxu0
        %v522 = vadd.f32 0.0, %v521
        %523 = vmatmul.f32.gmra.mxu0 %v472
        %v524 = vpop.f32.mrf.mxu0
        %v525 = vadd.f32 0.0, %v524
        %526 = vmatmul.f32.gmra.mxu0 %v475
        %v527 = vpop.f32.mrf.mxu0
        %v528 = vadd.f32 0.0, %v527
        %529 = vmatmul.f32.gmra.mxu0 %v478
        %v530 = vpop.f32.mrf.mxu0
        %v531 = vadd.f32 0.0, %v530
        %532 = vdwg.mxu0
        %v534 = vsel %vm325, %v368, 0
        %v537 = vsel %vm325, %v433, 0
        %v540 = vsel %vm325, %v436, 0
        %542 = vmatpush.xpose.msra.mxu0 0.0
        %543 = vmatpush.xpose.msra.mxu0 0.0
        %544 = vmatpush.xpose.msra.mxu0 0.0
        %545 = vmatpush.xpose.msra.mxu0 0.0
        %546 = vmatpush.xpose.msra.mxu0 0.0
        %547 = vmatpush.xpose.msra.mxu0 0.0
        %548 = vmatpush.xpose.msra.mxu0 0.0
        %549 = vmatpush.xpose.msra.mxu0 0.0
        %550 = vmatpush.xpose.msra.mxu0 0.0
        %551 = vmatpush.xpose.msra.mxu0 0.0
        %552 = vmatpush.xpose.msra.mxu0 0.0
        %553 = vmatpush.xpose.msra.mxu0 0.0
        %554 = vmatpush.xpose.msra.mxu0 0.0
        %555 = vmatpush.xpose.msra.mxu0 0.0
        %556 = vmatpush.xpose.msra.mxu0 %v540
        %557 = vmatpush.xpose.msra.mxu0 %v537
        %558 = vmatmul.f32.gmra.mxu0 %v534
        %v559 = vpop.f32.mrf.mxu0
        %v560 = vadd.f32 0.0, %v559
        %561 = vdwg.mxu0
        %v563 = vsel %vm325, %v371, 0
        %v566 = vsel %vm325, %v439, 0
        %v569 = vsel %vm325, %v442, 0
        %571 = vmatpush.xpose.msra.mxu0 0.0
        %572 = vmatpush.xpose.msra.mxu0 0.0
        %573 = vmatpush.xpose.msra.mxu0 0.0
        %574 = vmatpush.xpose.msra.mxu0 0.0
        %575 = vmatpush.xpose.msra.mxu0 0.0
        %576 = vmatpush.xpose.msra.mxu0 0.0
        %577 = vmatpush.xpose.msra.mxu0 0.0
        %578 = vmatpush.xpose.msra.mxu0 0.0
        %579 = vmatpush.xpose.msra.mxu0 0.0
        %580 = vmatpush.xpose.msra.mxu0 0.0
        %581 = vmatpush.xpose.msra.mxu0 0.0
        %582 = vmatpush.xpose.msra.mxu0 0.0
        %583 = vmatpush.xpose.msra.mxu0 0.0
        %584 = vmatpush.xpose.msra.mxu0 0.0
        %585 = vmatpush.xpose.msra.mxu0 %v569
        %586 = vmatpush.xpose.msra.mxu0 %v566
        %587 = vmatmul.f32.gmra.mxu0 %v563
        %v588 = vpop.f32.mrf.mxu0
        %v589 = vadd.f32 0.0, %v588
        %590 = vdwg.mxu0
        %v592 = vsel %vm325, %v374, 0
        %v595 = vsel %vm325, %v445, 0
        %v598 = vsel %vm325, %v448, 0
        %600 = vmatpush.xpose.msra.mxu0 0.0
        %601 = vmatpush.xpose.msra.mxu0 0.0
        %602 = vmatpush.xpose.msra.mxu0 0.0
        %603 = vmatpush.xpose.msra.mxu0 0.0
        %604 = vmatpush.xpose.msra.mxu0 0.0
        %605 = vmatpush.xpose.msra.mxu0 0.0
        %606 = vmatpush.xpose.msra.mxu0 0.0
        %607 = vmatpush.xpose.msra.mxu0 0.0
        %608 = vmatpush.xpose.msra.mxu0 0.0
        %609 = vmatpush.xpose.msra.mxu0 0.0
        %610 = vmatpush.xpose.msra.mxu0 0.0
        %611 = vmatpush.xpose.msra.mxu0 0.0
        %612 = vmatpush.xpose.msra.mxu0 0.0
        %613 = vmatpush.xpose.msra.mxu0 0.0
        %614 = vmatpush.xpose.msra.mxu0 %v598
        %615 = vmatpush.xpose.msra.mxu0 %v595
        %616 = vmatmul.f32.gmra.mxu0 %v592
        %v617 = vpop.f32.mrf.mxu0
        %v618 = vadd.f32 0.0, %v617
        %619 = vdwg.mxu0
        %v621 = vsel %vm325, %v377, 0
        %v624 = vsel %vm325, %v451, 0
        %v627 = vsel %vm325, %v454, 0
        %629 = vmatpush.xpose.msra.mxu0 0.0
        %630 = vmatpush.xpose.msra.mxu0 0.0
        %631 = vmatpush.xpose.msra.mxu0 0.0
        %632 = vmatpush.xpose.msra.mxu0 0.0
        %633 = vmatpush.xpose.msra.mxu0 0.0
        %634 = vmatpush.xpose.msra.mxu0 0.0
        %635 = vmatpush.xpose.msra.mxu0 0.0
        %636 = vmatpush.xpose.msra.mxu0 0.0
        %637 = vmatpush.xpose.msra.mxu0 0.0
        %638 = vmatpush.xpose.msra.mxu0 0.0
        %639 = vmatpush.xpose.msra.mxu0 0.0
        %640 = vmatpush.xpose.msra.mxu0 0.0
        %641 = vmatpush.xpose.msra.mxu0 0.0
        %642 = vmatpush.xpose.msra.mxu0 0.0
        %643 = vmatpush.xpose.msra.mxu0 %v627
        %644 = vmatpush.xpose.msra.mxu0 %v624
        %645 = vmatmul.f32.gmra.mxu0 %v621
        %v646 = vpop.f32.mrf.mxu0
        %v647 = vadd.f32 0.0, %v646
        %648 = vdwg.mxu0
        %v649 = vmul.f32 %v560, 0.17677669
        %v650 = vmul.f32 %v589, 0.17677669
        %v651 = vmul.f32 %v618, 0.17677669
        %v652 = vmul.f32 %v647, 0.17677669
        %vm653 = vcmask 130048
        %v654 = vsel %vm653, %v649, -inf
        %655 = vmax.xlane.f32.xlu0 %v654
        %v656 = vpop.xlane.xlu0 %655
        %v657 = vsel %vm653, %v650, -inf
        %658 = vmax.xlane.f32.xlu0 %v657
        %v659 = vpop.xlane.xlu0 %658
        %v660 = vsel %vm653, %v651, -inf
        %661 = vmax.xlane.f32.xlu0 %v660
        %v662 = vpop.xlane.xlu0 %661
        %v663 = vsel %vm653, %v652, -inf
        %664 = vmax.xlane.f32.xlu0 %v663
        %v665 = vpop.xlane.xlu0 %664
        %v666 = vsub.f32 %v649, %v656
        %v667 = vsub.f32 %v650, %v659
        %v668 = vsub.f32 %v651, %v662
        %v669 = vsub.f32 %v652, %v665
        %v670 = vmul.f32 %v666, 1.442695
        %v671 = vpow.pop %v670
        %v672 = vmul.f32 %v667, 1.442695
        %v673 = vpow.pop %v672
        %v674 = vmul.f32 %v668, 1.442695
        %v675 = vpow.pop %v674
        %v676 = vmul.f32 %v669, 1.442695
        %v677 = vpow.pop %v676
        %v678 = vsel %vm653, %v671, 0.0
        %679 = vadd.xlane.f32.xlu0 %v678
        %v680 = vpop.xlane.xlu0 %679
        %v681 = vsel %vm653, %v673, 0.0
        %682 = vadd.xlane.f32.xlu0 %v681
        %v683 = vpop.xlane.xlu0 %682
        %v684 = vsel %vm653, %v675, 0.0
        %685 = vadd.xlane.f32.xlu0 %v684
        %v686 = vpop.xlane.xlu0 %685
        %v687 = vsel %vm653, %v677, 0.0
        %688 = vadd.xlane.f32.xlu0 %v687
        %v689 = vpop.xlane.xlu0 %688
        %v690 = vrcp.pop %v680
        %v691 = vmul.f32 %v680, %v690
        %v692 = vsub.f32 1.0, %v691
        %v693 = vmul.f32 %v690, %v692
        %v694 = vadd.f32 %v690, %v693
        %vm695 = vweird.f32 %v680
        %vm696 = vweird.f32 %v690
        %vm697 = vmor %vm695, %vm696
        %v698 = vsel %vm697, %v690, %v694
        %v699 = vand.u32 2147483647, %v680
        %vm700 = vcmp.eq.f32.partialorder %v699, 8.507059e+37
        %v701 = vand.u32 %v680, 2147483648
        %v702 = vor.u32 1.1754944e-38, %v701
        %v703 = vsel %vm700, %v702, %v698
        %v704 = vmul.f32 %v671, %v703
        %v705 = vrcp.pop %v683
        %v706 = vmul.f32 %v683, %v705
        %v707 = vsub.f32 1.0, %v706
        %v708 = vmul.f32 %v705, %v707
        %v709 = vadd.f32 %v705, %v708
        %vm710 = vweird.f32 %v683
        %vm711 = vweird.f32 %v705
        %vm712 = vmor %vm710, %vm711
        %v713 = vsel %vm712, %v705, %v709
        %v714 = vand.u32 2147483647, %v683
        %vm715 = vcmp.eq.f32.partialorder %v714, 8.507059e+37
        %v716 = vand.u32 %v683, 2147483648
        %v717 = vor.u32 1.1754944e-38, %v716
        %v718 = vsel %vm715, %v717, %v713
        %v719 = vmul.f32 %v673, %v718
        %v720 = vrcp.pop %v686
        %v721 = vmul.f32 %v686, %v720
        %v722 = vsub.f32 1.0, %v721
        %v723 = vmul.f32 %v720, %v722
        %v724 = vadd.f32 %v720, %v723
        %vm725 = vweird.f32 %v686
        %vm726 = vweird.f32 %v720
        %vm727 = vmor %vm725, %vm726
        %v728 = vsel %vm727, %v720, %v724
        %v729 = vand.u32 2147483647, %v686
        %vm730 = vcmp.eq.f32.partialorder %v729, 8.507059e+37
        %v731 = vand.u32 %v686, 2147483648
        %v732 = vor.u32 1.1754944e-38, %v731
        %v733 = vsel %vm730, %v732, %v728
        %v734 = vmul.f32 %v675, %v733
        %v735 = vrcp.pop %v689
        %v736 = vmul.f32 %v689, %v735
        %v737 = vsub.f32 1.0, %v736
        %v738 = vmul.f32 %v735, %v737
        %v739 = vadd.f32 %v735, %v738
        %vm740 = vweird.f32 %v689
        %vm741 = vweird.f32 %v735
        %vm742 = vmor %vm740, %vm741
        %v743 = vsel %vm742, %v735, %v739
        %v744 = vand.u32 2147483647, %v689
        %vm745 = vcmp.eq.f32.partialorder %v744, 8.507059e+37
        %v746 = vand.u32 %v689, 2147483648
        %v747 = vor.u32 1.1754944e-38, %v746
        %v748 = vsel %vm745, %v747, %v743
        %v749 = vmul.f32 %v677, %v748
        %v751 = vsel %vm653, %v704, 0
        %753 = vmatpush.msra.mxu0 0.0
        %754 = vmatpush.msra.mxu0 0.0
        %755 = vmatpush.msra.mxu0 0.0
        %756 = vmatpush.msra.mxu0 0.0
        %757 = vmatpush.msra.mxu0 0.0
        %758 = vmatpush.msra.mxu0 0.0
        %759 = vmatpush.msra.mxu0 0.0
        %760 = vmatpush.msra.mxu0 0.0
        %761 = vmatpush.msra.mxu0 0.0
        %762 = vmatpush.msra.mxu0 0.0
        %763 = vmatpush.msra.mxu0 0.0
        %764 = vmatpush.msra.mxu0 0.0
        %765 = vmatpush.msra.mxu0 0.0
        %766 = vmatpush.msra.mxu0 0.0
        %767 = vmatpush.msra.mxu0 %v513
        %768 = vmatpush.msra.mxu0 %v510
        %769 = vmatmul.f32.gmra.mxu0 %v751
        %v770 = vpop.f32.mrf.mxu0
        %v771 = vadd.f32 0.0, %v770
        %772 = vdwg.mxu0
        %v774 = vsel %vm653, %v719, 0
        %776 = vmatpush.msra.mxu0 0.0
        %777 = vmatpush.msra.mxu0 0.0
        %778 = vmatpush.msra.mxu0 0.0
        %779 = vmatpush.msra.mxu0 0.0
        %780 = vmatpush.msra.mxu0 0.0
        %781 = vmatpush.msra.mxu0 0.0
        %782 = vmatpush.msra.mxu0 0.0
        %783 = vmatpush.msra.mxu0 0.0
        %784 = vmatpush.msra.mxu0 0.0
        %785 = vmatpush.msra.mxu0 0.0
        %786 = vmatpush.msra.mxu0 0.0
        %787 = vmatpush.msra.mxu0 0.0
        %788 = vmatpush.msra.mxu0 0.0
        %789 = vmatpush.msra.mxu0 0.0
        %790 = vmatpush.msra.mxu0 %v519
        %791 = vmatpush.msra.mxu0 %v516
        %792 = vmatmul.f32.gmra.mxu0 %v774
        %v793 = vpop.f32.mrf.mxu0
        %v794 = vadd.f32 0.0, %v793
        %795 = vdwg.mxu0
        %v797 = vsel %vm653, %v734, 0
        %799 = vmatpush.msra.mxu0 0.0
        %800 = vmatpush.msra.mxu0 0.0
        %801 = vmatpush.msra.mxu0 0.0
        %802 = vmatpush.msra.mxu0 0.0
        %803 = vmatpush.msra.mxu0 0.0
        %804 = vmatpush.msra.mxu0 0.0
        %805 = vmatpush.msra.mxu0 0.0
        %806 = vmatpush.msra.mxu0 0.0
        %807 = vmatpush.msra.mxu0 0.0
        %808 = vmatpush.msra.mxu0 0.0
        %809 = vmatpush.msra.mxu0 0.0
        %810 = vmatpush.msra.mxu0 0.0
        %811 = vmatpush.msra.mxu0 0.0
        %812 = vmatpush.msra.mxu0 0.0
        %813 = vmatpush.msra.mxu0 %v525
        %814 = vmatpush.msra.mxu0 %v522
        %815 = vmatmul.f32.gmra.mxu0 %v797
        %v816 = vpop.f32.mrf.mxu0
        %v817 = vadd.f32 0.0, %v816
        %818 = vdwg.mxu0
        %v820 = vsel %vm653, %v749, 0
        %822 = vmatpush.msra.mxu0 0.0
        %823 = vmatpush.msra.mxu0 0.0
        %824 = vmatpush.msra.mxu0 0.0
        %825 = vmatpush.msra.mxu0 0.0
        %826 = vmatpush.msra.mxu0 0.0
        %827 = vmatpush.msra.mxu0 0.0
        %828 = vmatpush.msra.mxu0 0.0
        %829 = vmatpush.msra.mxu0 0.0
        %830 = vmatpush.msra.mxu0 0.0
        %831 = vmatpush.msra.mxu0 0.0
        %832 = vmatpush.msra.mxu0 0.0
        %833 = vmatpush.msra.mxu0 0.0
        %834 = vmatpush.msra.mxu0 0.0
        %835 = vmatpush.msra.mxu0 0.0
        %836 = vmatpush.msra.mxu0 %v531
        %837 = vmatpush.msra.mxu0 %v528
        %838 = vmatmul.f32.gmra.mxu0 %v820
        %v839 = vpop.f32.mrf.mxu0
        %v840 = vadd.f32 0.0, %v839
        %841 = vdwg.mxu0
        %v843 = vsel %vm325, %v771, 0
        %v846 = vsel %vm325, %v794, 0
        %v849 = vsel %vm325, %v817, 0
        %v852 = vsel %vm325, %v840, 0
        %v855 = vsel %vm325, %v301, 0
        %v858 = vsel %vm325, %v302, 0
        %v861 = vsel %vm325, %v303, 0
        %v864 = vsel %vm325, %v304, 0
        %866 = vmatpush.xpose.msra.mxu0 0.0
        %867 = vmatpush.xpose.msra.mxu0 0.0
        %868 = vmatpush.xpose.msra.mxu0 0.0
        %869 = vmatpush.xpose.msra.mxu0 0.0
        %870 = vmatpush.xpose.msra.mxu0 0.0
        %871 = vmatpush.xpose.msra.mxu0 0.0
        %872 = vmatpush.xpose.msra.mxu0 0.0
        %873 = vmatpush.xpose.msra.mxu0 0.0
        %874 = vmatpush.xpose.msra.mxu0 0.0
        %875 = vmatpush.xpose.msra.mxu0 0.0
        %876 = vmatpush.xpose.msra.mxu0 0.0
        %877 = vmatpush.xpose.msra.mxu0 0.0
        %878 = vmatpush.xpose.msra.mxu0 %v864
        %879 = vmatpush.xpose.msra.mxu0 %v861
        %880 = vmatpush.xpose.msra.mxu0 %v858
        %881 = vmatpush.xpose.msra.mxu0 %v855
        %882 = vmatmul.f32.gmra.mxu0 %v843
        %v883 = vpop.f32.mrf.mxu0
        %v884 = vadd.f32 0.0, %v883
        %885 = vmatmul.f32.gmra.mxu0 %v846
        %v886 = vpop.f32.mrf.mxu0
        %v887 = vadd.f32 0.0, %v886
        %888 = vmatmul.f32.gmra.mxu0 %v849
        %v889 = vpop.f32.mrf.mxu0
        %v890 = vadd.f32 0.0, %v889
        %891 = vmatmul.f32.gmra.mxu0 %v852
        %v892 = vpop.f32.mrf.mxu0
        %v893 = vadd.f32 0.0, %v892
        %894 = vdwg.mxu0
        %895 = vst.msk [vmem:[%s278] sm:$0xff] %vm325, %v884
        %896 = vst.msk [vmem:[%s278 + $0x8] sm:$0xff] %vm325, %v887
        %897 = vst.msk [vmem:[%s278 + $0x10] sm:$0xff] %vm325, %v890
        %898 = vst.msk [vmem:[%s278 + $0x18] sm:$0xff] %vm325, %v893
        %s899 = sand.u32 %s131, 1
        %s900 = scalar_lea.sflag [#allocation4], %s899
        %s901 = sand.u32 %s131, 1
        %s902 = smul.addr %s901, 32
        %s903 = scalar_lea.vmem [#allocation7], %s902
        // Predicated region
        $region45: #{tpu_custom_call.1} parent=35 // pred_check
          %p904 = pneg %p141
        $region46: #{tpu_custom_call.1} parent=35 // pred_check_branch
          %906 = sbr.rel (%p904) target = $region48
        $region47: #{tpu_custom_call.1} parent=35 // pred_region
          %s907 = smul.u32 4, %s24
          %909 = vsyncadd %s900, 0
          %s910 = smul.addr %s907, 8
          %s911 = scalar_lea.hbm %s4, %s910
          %s912 = sshll.u32 %s903, 4
          %s913 = int_to_ptr.vmem [resolvable:$true] %s912
          %s914 = sshll.u32 %s911, 4
          %s915 = int_to_ptr.hbm [resolvable:$true] %s914
          %920 = dma.vmem_to_hbm [thread:$0]  %s913, 512, %s915, %s900, 128, 128, 8
        $region48: #{tpu_custom_call.1} parent=35 // pred_fallthru
          _
      $region36: #{tpu_custom_call.1} parent=5 // pred_fallthru
        _
      %p921 = scmp.le.s32.totalorder 2, %s19
      // Predicated region
      $region49: #{tpu_custom_call.1} parent=5 // pred_check
        %p922 = pneg %p921
      $region50: #{tpu_custom_call.1} parent=5 // pred_check_branch
        %924 = sbr.rel (%p922) target = $region52
      $region51: #{tpu_custom_call.1} parent=5 // pred_region
        %s925 = ssub.s32 %s19, 2
        // Predicated region
        $region53: #{tpu_custom_call.1} parent=51 // pred_check
          %p926 = pneg %p147
        $region54: #{tpu_custom_call.1} parent=51 // pred_check_branch
          %928 = sbr.rel (%p926) target = $region56
        $region55: #{tpu_custom_call.1} parent=51 // pred_region
          %s929 = sand.u32 %s132, 1
          %s930 = scalar_lea.sflag [#allocation4], %s929
          %s931 = sand.u32 %s132, 1
          %s932 = smul.addr %s931, 32
          %s933 = scalar_lea.vmem [#allocation7], %s932
          %935 = dma.done %s930, 512
        $region56: #{tpu_custom_call.1} parent=51 // pred_fallthru
          _
      $region52: #{tpu_custom_call.1} parent=5 // pred_fallthru
        _
    $region6: #{tpu_custom_call.1} parent=1 // loop_footer
      %s23 = sadd.s32 1, %s19
    $region7: #{tpu_custom_call.1} parent=1 // loop_footer_branch
      %18 = sbr.rel target = $region3
    $region8: #{tpu_custom_call.1} parent=1 // loop_exit
      _
    %936 = vsyncpa [#allocation3], 1
    %s937 = scalar_lea.sflag [#allocation3], 1
    %938 = vsyncpa %s937, 1
    %939 = vsyncpa [#allocation6], 1
    %s940 = scalar_lea.sflag [#allocation6], 1
    %941 = vsyncpa %s940, 1
    %942 = vsyncpa [#allocation4], 1
    %s943 = scalar_lea.sflag [#allocation4], 1
    %944 = vsyncpa %s943, 1

</llo_original>
